<compile_context>
chip_gen: v7x
topology: tpu7x:2x2x1
jax: 0.10.0
libtpu: 0.0.40
codegen_flags: <defaults>
</compile_context>

<pallas_src>
import jax
import jax.numpy as jnp
from jax.experimental import pallas as pl
from jax.experimental.pallas import tpu as pltpu

VOCAB = 10178
EMB = 512
NUM_HEADS = 40
NUM_CLASSES = 2
OUT_DIM = NUM_HEADS * NUM_CLASSES   # 80
OUT_PAD = 128                       # lane-dense padded output width
TBLK_MAX = 1024                     # tokens per grid step (upper bound)


def _heads_kernel(emb_ref, w_ref, b_ref, out_ref):
    # emb_ref: (TBLK, EMB) bf16   w_ref: (EMB, OUT_PAD) bf16   b_ref: (1, OUT_PAD) f32
    acc = jnp.dot(emb_ref[...], w_ref[...], preferred_element_type=jnp.float32)
    out_ref[...] = (acc + b_ref[...]).astype(out_ref.dtype)   # bf16 epilogue cast


def _const_spec(shape):
    """Grid-invariant (resident) block; single-buffer it when the API allows."""
    idx_map = lambda t: (0, 0)
    try:
        return pl.BlockSpec(shape, idx_map, pipeline_mode=pl.Buffered(1))
    except (TypeError, AttributeError):
        # Older BlockSpec without pipeline_mode: double-buffering a constant
        # 128 KiB block is harmless (index never changes -> no re-DMA).
        return pl.BlockSpec(shape, idx_map)


def _pick_tblk(n_tok):
    """Largest token block <= TBLK_MAX while keeping >=2 grid blocks when possible."""
    tblk = pl.cdiv(pl.cdiv(n_tok, 2), 8) * 8   # ~half the tokens, rounded to sublanes
    return max(8, min(TBLK_MAX, tblk))


def _prepare_params(emb_table_f32, w_heads, b_heads):
    """One-time inference-format conversion (bf16 table, stacked/padded heads)."""
    emb_bf16 = emb_table_f32.astype(jnp.bfloat16)                       # (VOCAB, EMB)
    # Columns ordered head-major: W[:, h*NUM_CLASSES + c] = w_heads[h, c, :]
    w_stacked = jnp.transpose(w_heads, (2, 0, 1)).reshape(EMB, OUT_DIM)
    w_p = jnp.zeros((EMB, OUT_PAD), jnp.bfloat16).at[:, :OUT_DIM].set(
        w_stacked.astype(jnp.bfloat16))
    b_p = jnp.zeros((1, OUT_PAD), jnp.float32).at[:, :OUT_DIM].set(
        b_heads.reshape(1, OUT_DIM).astype(jnp.float32))
    return emb_bf16, w_p, b_p


def identity_spoof_forward(x_idx, emb_bf16, w_p, b_p):
    """x_idx: (B, S) int token ids.  Returns (B, NUM_HEADS, S, NUM_CLASSES) float32."""
    B, S = x_idx.shape
    n_tok = B * S
    flat_idx = jnp.clip(x_idx.reshape(n_tok).astype(jnp.int32), 0, VOCAB - 1)

    # Gather from the bf16 table (half the HBM read of an f32 gather); the
    # result is already in the kernel's matmul input dtype.
    emb = jnp.take(emb_bf16, flat_idx, axis=0)            # (n_tok, EMB) bf16

    tblk = _pick_tblk(n_tok)
    grid = (pl.cdiv(n_tok, tblk),)                        # partial final block is fine

    grid_spec = pltpu.PrefetchScalarGridSpec(
        num_scalar_prefetch=0,
        grid=grid,
        in_specs=[
            pl.BlockSpec((tblk, EMB), lambda t: (t, 0)),  # token block of embeddings
            _const_spec((EMB, OUT_PAD)),                  # stacked head weights (resident)
            _const_spec((1, OUT_PAD)),                    # stacked bias (resident)
        ],
        out_specs=pl.BlockSpec((tblk, OUT_PAD), lambda t: (t, 0)),
    )

    out_flat = pl.pallas_call(
        _heads_kernel,
        out_shape=jax.ShapeDtypeStruct((n_tok, OUT_PAD), jnp.bfloat16),
        grid_spec=grid_spec,
        compiler_params=pltpu.CompilerParams(
            dimension_semantics=("parallel",)),           # independent token blocks
    )(emb, w_p, b_p)

    out = out_flat[:, :OUT_DIM].astype(jnp.float32).reshape(
        B, S, NUM_HEADS, NUM_CLASSES)
    # torch.cat(..., dim=1) of unsqueezed head outputs -> heads on axis 1.
    # (Drop this transpose if downstream can consume (B, S, H, C) layout.)
    return jnp.transpose(out, (0, 2, 1, 3))


def _make_params(key):
    k_emb, k_w, k_b = jax.random.split(key, 3)
    # nn.Embedding default init ~ N(0, 1)
    emb_table = jax.random.normal(k_emb, (VOCAB, EMB), dtype=jnp.float32)
    # nn.Linear default init ~ U(-1/sqrt(fan_in), 1/sqrt(fan_in)), fan_in = 512
    bound = 1.0 / jnp.sqrt(jnp.float32(EMB))
    w_heads = jax.random.uniform(
        k_w, (NUM_HEADS, NUM_CLASSES, EMB), minval=-bound, maxval=bound,
        dtype=jnp.float32)
    b_heads = jax.random.uniform(
        k_b, (NUM_HEADS, NUM_CLASSES), minval=-bound, maxval=bound,
        dtype=jnp.float32)
    return emb_table, w_heads, b_heads


def _reference_f32(x_idx, emb_table, w_heads, b_heads):
    # Pure-JAX f32 reference mirroring the PyTorch forward.
    emb = jnp.take(emb_table, x_idx, axis=0)                       # (B, S, EMB)
    per_head = jnp.einsum("bse,hce->bhsc", emb, w_heads,
                          precision=jax.lax.Precision.HIGHEST)
    return per_head + b_heads[None, :, None, :]                    # (B, H, S, C)


def _reference_bf16_matched(x_idx, emb_table, w_heads, b_heads):
    # Same math with bf16-rounded matmul inputs and bf16-rounded output,
    # matching the kernel's precision choices.
    emb = jnp.take(emb_table, x_idx, axis=0).astype(jnp.bfloat16).astype(jnp.float32)
    w = w_heads.astype(jnp.bfloat16).astype(jnp.float32)
    per_head = jnp.einsum("bse,hce->bhsc", emb, w,
                          precision=jax.lax.Precision.HIGHEST)
    out = per_head + b_heads[None, :, None, :]
    return out.astype(jnp.bfloat16).astype(jnp.float32)


if __name__ == "__main__":
    key = jax.random.PRNGKey(0)
    k_params, k_x = jax.random.split(key)

    emb_table, w_heads, b_heads = _make_params(k_params)
    emb_bf16, w_p, b_p = _prepare_params(emb_table, w_heads, b_heads)

    B, S = 2, 8
    x = jax.random.randint(k_x, (B, S), 0, VOCAB, dtype=jnp.int32)

    fwd = jax.jit(identity_spoof_forward)
    out = jax.block_until_ready(fwd(x, emb_bf16, w_p, b_p))
    assert out.shape == (B, NUM_HEADS, S, NUM_CLASSES), out.shape
    assert out.dtype == jnp.float32, out.dtype

    # Tight check vs a reference using the same bf16 rounding as the kernel.
    ref_bf16 = _reference_bf16_matched(x, emb_table, w_heads, b_heads)
    assert jnp.allclose(out, ref_bf16, atol=2e-2, rtol=2e-2), \
        "mismatch vs bf16-matched reference"

    # Loose check vs the exact-f32 reference (bf16 rounding error budget).
    ref_f32 = _reference_f32(x, emb_table, w_heads, b_heads)
    assert jnp.allclose(out, ref_f32, atol=6e-2, rtol=6e-2), \
        "mismatch vs f32 reference"

    print("KERNEL_OK")
</pallas_src>

<mosaic_0001>
module attributes {stable_mosaic.version = 11 : i64} {
  func.func @_heads_kernel(%arg0: i32, %arg1: memref<8x512xbf16, #tpu.memory_space<vmem>>, %arg2: memref<512x128xbf16, #tpu.memory_space<vmem>>, %arg3: memref<1x128xf32, #tpu.memory_space<vmem>>, %arg4: memref<8x128xbf16, #tpu.memory_space<vmem>>) attributes {dimension_semantics = [#tpu.dimension_semantics<parallel>], iteration_bounds = array<i64: 2>, scalar_prefetch = 0 : i64, scratch_operands = 0 : i64, tpu.core_type = #tpu.core_type<tc>, window_params = [{transform_indices = @transform_0, window_bounds = array<i64: 8, 512>}, {pipeline_mode = #tpu.pipeline_mode<synchronous>, transform_indices = @transform_1, window_bounds = array<i64: 512, 128>}, {pipeline_mode = #tpu.pipeline_mode<synchronous>, transform_indices = @transform_2, window_bounds = array<i64: 1, 128>}, {transform_indices = @transform_3, window_bounds = array<i64: 8, 128>}]} {
    %c0 = arith.constant 0 : index
    %c0_0 = arith.constant 0 : index
    %0 = vector.load %arg1[%c0, %c0_0] : memref<8x512xbf16, #tpu.memory_space<vmem>>, vector<8x512xbf16>
    %c0_1 = arith.constant 0 : index
    %c0_2 = arith.constant 0 : index
    %1 = vector.load %arg2[%c0_1, %c0_2] : memref<512x128xbf16, #tpu.memory_space<vmem>>, vector<512x128xbf16>
    %cst = arith.constant dense<0.000000e+00> : vector<8x128xf32>
    %2 = tpu.matmul %0, %1, %cst {dimension_numbers = #tpu.dot_dimension_numbers<[1], [0], [0], [1], [0, 0, 1, 1], [], []>} : vector<8x512xbf16>, vector<512x128xbf16>, vector<8x128xf32> -> vector<8x128xf32>
    %c0_3 = arith.constant 0 : index
    %c0_4 = arith.constant 0 : index
    %3 = vector.load %arg3[%c0_3, %c0_4] : memref<1x128xf32, #tpu.memory_space<vmem>>, vector<1x128xf32>
    %4 = vector.broadcast %3 : vector<1x128xf32> to vector<8x128xf32>
    %5 = arith.addf %2, %4 : vector<8x128xf32>
    %6 = arith.truncf %5 : vector<8x128xf32> to vector<8x128xbf16>
    %c0_5 = arith.constant 0 : index
    %c0_6 = arith.constant 0 : index
    %7 = vector.load %arg4[%c0_5, %c0_6] : memref<8x128xbf16, #tpu.memory_space<vmem>>, vector<8x128xbf16>
    tpu.vector_store %arg4[%c0_5, %c0_6], %6 {strides = array<i32>} : memref<8x128xbf16, #tpu.memory_space<vmem>>, vector<8x128xbf16>,
    return
  }
  func.func @transform_0(%arg0: i32) -> (i32, i32) {
    %c0_i32 = arith.constant 0 : i32
    %c0_i32_0 = arith.constant 0 : i32
    return %arg0, %c0_i32 : i32, i32
  }
  func.func @transform_1(%arg0: i32) -> (i32, i32) {
    %c0_i32 = arith.constant 0 : i32
    %c0_i32_0 = arith.constant 0 : i32
    %c0_i32_1 = arith.constant 0 : i32
    return %c0_i32, %c0_i32_0 : i32, i32
  }
  func.func @transform_2(%arg0: i32) -> (i32, i32) {
    %c0_i32 = arith.constant 0 : i32
    %c0_i32_0 = arith.constant 0 : i32
    %c0_i32_1 = arith.constant 0 : i32
    return %c0_i32, %c0_i32_0 : i32, i32
  }
  func.func @transform_3(%arg0: i32) -> (i32, i32) {
    %c0_i32 = arith.constant 0 : i32
    %c0_i32_0 = arith.constant 0 : i32
    return %arg0, %c0_i32 : i32, i32
  }
}

</mosaic_0001>

<llo_original>
// kernel: identity_spoof_forward.1
$region0: #{identity_spoof_forward.1}
  #allocation0 [shape = 'u32[]', space=smem, size = 0x4, offset = 0x4, fixed_abs, tag = 'smem constant byte address 0x4 - core index']
  #allocation1 [shape = 'u32[144,128]{1,0:T(1,128)}', space=vmem, size = 0x12000, scoped, tag = 'internal scratch']
  %s0 = inlined_call_operand.vmem [shape: bf16[16,512], index: 0, kind: input, shape index: {}]
  %s1 = inlined_call_operand.hbm [shape: bf16[512,128], index: 1, kind: input, shape index: {}]
  %s2 = inlined_call_operand.hbm [shape: f32[1,128], index: 2, kind: input, shape index: {}]
  %s3 = inlined_call_operand.vmem [shape: bf16[16,128], index: 3, kind: output, shape index: {}]
  %s4 = sld [smem:[#allocation0]]
  $region53: #{identity_spoof_forward.1} parent=0
    _
  %s6 = ssub.s32 1, %s4
  %s7 = scalar_select 0, %s6, %s4
  $region1: #{identity_spoof_forward.1} parent=0
    #allocation2 [shape = 'u8[131072]{0}', space=vmem, size = 0x20000, scoped, tag = 'input window, operand 1, single buffered']
    #allocation3 [shape = 's32[2]{0}', space=sflag, size = 0x8, scoped, tag = 'scoped memory for identity_spoof_forward.1']
    #allocation4 [shape = 'u8[512]{0}', space=vmem, size = 0x400, scoped, tag = 'input window, operand 2, single buffered']
    #allocation5 [shape = 's32[1]{0}', space=sflag, size = 0x4, scoped, tag = 'scoped memory for identity_spoof_forward.1']
    %8 = vsyncpa [#allocation3], 0
    %9 = vsyncpa [#allocation5], 0
    loop: start=0, step=1, limit=4
    $region2: #{identity_spoof_forward.1} parent=1 // loop_pre_header
      _
    $region3: #{identity_spoof_forward.1} parent=1 // loop_header
      %s11 = sphi 0, %s15
      %p12 = scmp.ge.s32.totalorder %s11, 4
      %s21 = sphi 0, %s23
      %s24 = sphi 0, %s21
      %s25 = sphi 0, %s24
      %s41 = sphi 0, %s25
      %s45 = sphi 0, %s45
      %s47 = sphi 0, %s45
      %s48 = sphi 0, %s47
      %s62 = sphi 0, %s48
      %s66 = sphi 0, %s66
      %s68 = sphi 0, %s66
      %s69 = sphi 0, %s68
      %s83 = sphi 0, %s69
      %s89 = sphi 0, %s91
      %s92 = sphi 0, %s89
      %s93 = sphi 0, %s92
      %s109 = sphi 0, %s93
    $region4: #{identity_spoof_forward.1} parent=1 // loop_header_branch
      %14 = sbr.rel (%p12) target = $region8
    $region5: #{identity_spoof_forward.1} parent=1 // loop_body
      %s16 = ssub.s32 %s11, 1
      %s17 = ssub.s32 %s11, 2
      %s18 = sadd.s32 %s11, 1
      %s19 = ssub.s32 %s11, %s18
      %p20 = scmp.eq.s32.totalorder %s19, 0
      %s22 = sadd.s32 %s21, 1
      %s23 = scalar_select %p20, %s21, %s22
      %p26 = pneg %p20
      %p27 = scmp.eq.s32.totalorder %s11, 1
      %p28 = por %p26, %p27
      %p29 = scmp.ne.s32.totalorder %s21, %s24
      %p30 = scmp.eq.s32.totalorder %s11, 0
      %p31 = por %p29, %p30
      %p32 = scmp.ne.s32.totalorder %s21, %s24
      %p33 = scmp.eq.s32.totalorder %s16, 1
      %p34 = por %p32, %p33
      %p35 = scmp.ne.s32.totalorder %s24, %s25
      %p36 = scmp.eq.s32.totalorder %s16, 0
      %p37 = por %p35, %p36
      %p38 = scmp.ne.s32.totalorder %s24, %s25
      %p39 = scmp.eq.s32.totalorder %s17, 1
      %p40 = por %p38, %p39
      %p42 = scmp.ne.s32.totalorder %s25, %s41
      %p43 = scmp.eq.s32.totalorder %s17, 0
      %p44 = por %p42, %p43
      %s46 = sadd.s32 %s45, 1
      %p49 = scmp.eq.s32.totalorder %s11, 1
      %p50 = scmp.ne.s32.totalorder %s45, %s47
      %p51 = scmp.eq.s32.totalorder %s11, 0
      %p52 = por %p50, %p51
      %p53 = scmp.ne.s32.totalorder %s45, %s47
      %p54 = scmp.eq.s32.totalorder %s16, 1
      %p55 = por %p53, %p54
      %p56 = scmp.ne.s32.totalorder %s47, %s48
      %p57 = scmp.eq.s32.totalorder %s16, 0
      %p58 = por %p56, %p57
      %p59 = scmp.ne.s32.totalorder %s47, %s48
      %p60 = scmp.eq.s32.totalorder %s17, 1
      %p61 = por %p59, %p60
      %p63 = scmp.ne.s32.totalorder %s48, %s62
      %p64 = scmp.eq.s32.totalorder %s17, 0
      %p65 = por %p63, %p64
      %s67 = sadd.s32 %s66, 1
      %p70 = scmp.eq.s32.totalorder %s11, 1
      %p71 = scmp.ne.s32.totalorder %s66, %s68
      %p72 = scmp.eq.s32.totalorder %s11, 0
      %p73 = por %p71, %p72
      %p74 = scmp.ne.s32.totalorder %s66, %s68
      %p75 = scmp.eq.s32.totalorder %s16, 1
      %p76 = por %p74, %p75
      %p77 = scmp.ne.s32.totalorder %s68, %s69
      %p78 = scmp.eq.s32.totalorder %s16, 0
      %p79 = por %p77, %p78
      %p80 = scmp.ne.s32.totalorder %s68, %s69
      %p81 = scmp.eq.s32.totalorder %s17, 1
      %p82 = por %p80, %p81
      %p84 = scmp.ne.s32.totalorder %s69, %s83
      %p85 = scmp.eq.s32.totalorder %s17, 0
      %p86 = por %p84, %p85
      %s87 = ssub.s32 %s11, %s18
      %p88 = scmp.eq.s32.totalorder %s87, 0
      %s90 = sadd.s32 %s89, 1
      %s91 = scalar_select %p88, %s89, %s90
      %p94 = pneg %p88
      %p95 = scmp.eq.s32.totalorder %s11, 1
      %p96 = por %p94, %p95
      %p97 = scmp.ne.s32.totalorder %s89, %s92
      %p98 = scmp.eq.s32.totalorder %s11, 0
      %p99 = por %p97, %p98
      %p100 = scmp.ne.s32.totalorder %s89, %s92
      %p101 = scmp.eq.s32.totalorder %s16, 1
      %p102 = por %p100, %p101
      %p103 = scmp.ne.s32.totalorder %s92, %s93
      %p104 = scmp.eq.s32.totalorder %s16, 0
      %p105 = por %p103, %p104
      %p106 = scmp.ne.s32.totalorder %s92, %s93
      %p107 = scmp.eq.s32.totalorder %s17, 1
      %p108 = por %p106, %p107
      %p110 = scmp.ne.s32.totalorder %s93, %s109
      %p111 = scmp.eq.s32.totalorder %s17, 0
      %p112 = por %p110, %p111
      %p113 = scmp.le.s32.totalorder 1, %s11
      %p114 = scmp.lt.s32.totalorder %s11, 3
      %p115 = pnand %p113, %p114
      %p116 = pneg %p115
      // Predicated region
      $region9: #{identity_spoof_forward.1} parent=5 // pred_check
        _
      $region10: #{identity_spoof_forward.1} parent=5 // pred_check_branch
        %118 = sbr.rel (%p115) target = $region12
      $region11: #{identity_spoof_forward.1} parent=5 // pred_region
        %s119 = ssub.s32 %s11, 1
        // Predicated region
        $region13: #{identity_spoof_forward.1} parent=11 // pred_check
          %p120 = pneg %p58
        $region14: #{identity_spoof_forward.1} parent=11 // pred_check_branch
          %122 = sbr.rel (%p120) target = $region16
        $region15: #{identity_spoof_forward.1} parent=11 // pred_region
          %s124 = ssub.s32 4096, 4096
          %125 = vsyncadd [#allocation3], %s124
          %s126 = sshll.u32 [#allocation2], 4
          %s127 = int_to_ptr.vmem [resolvable:$true] %s126
          %132 = dma.hbm_to_vmem [thread:$0]  %s1, 4096, %s127, [#allocation3], 64, 64, 4
        $region16: #{identity_spoof_forward.1} parent=11 // pred_fallthru
          _
        // Predicated region
        $region17: #{identity_spoof_forward.1} parent=11 // pred_check
          %p133 = pneg %p79
        $region18: #{identity_spoof_forward.1} parent=11 // pred_check_branch
          %135 = sbr.rel (%p133) target = $region20
        $region19: #{identity_spoof_forward.1} parent=11 // pred_region
          %s137 = ssub.s32 16, 16
          %138 = vsyncadd [#allocation5], %s137
          %s140 = sshll.u32 [#allocation4], 4
          %s141 = int_to_ptr.vmem [resolvable:$true] %s140
          %143 = dma.hbm_to_vmem [thread:$0]  %s2, 16, %s141, [#allocation5]
        $region20: #{identity_spoof_forward.1} parent=11 // pred_fallthru
          _
      $region12: #{identity_spoof_forward.1} parent=5 // pred_fallthru
        _
      %p144 = scmp.lt.s32.totalorder %s11, 2
      // Predicated region
      $region21: #{identity_spoof_forward.1} parent=5 // pred_check
        %p145 = pneg %p144
      $region22: #{identity_spoof_forward.1} parent=5 // pred_check_branch
        %147 = sbr.rel (%p145) target = $region24
      $region23: #{identity_spoof_forward.1} parent=5 // pred_region
        // Predicated region
        $region25: #{identity_spoof_forward.1} parent=23 // pred_check
          %p148 = pneg %p31
        $region26: #{identity_spoof_forward.1} parent=23 // pred_check_branch
          %150 = sbr.rel (%p148) target = $region28
        $region27: #{identity_spoof_forward.1} parent=23 // pred_region
          %p151 = scmp.lt.s32.totalorder %s11, 1
          %s152 = scalar_select %p151, %s11, 1
          %s153 = smul.addr %s152, 4
          %s154 = smul.addr %s153, 4
          %s155 = scalar_lea.vmem %s0, %s154
        $region28: #{identity_spoof_forward.1} parent=23 // pred_fallthru
          _
      $region24: #{identity_spoof_forward.1} parent=5 // pred_fallthru
        _
      %p156 = scmp.le.s32.totalorder 1, %s11
      %p157 = scmp.lt.s32.totalorder %s11, 3
      %p158 = pnand %p156, %p157
      %p159 = pneg %p158
      // Predicated region
      $region29: #{identity_spoof_forward.1} parent=5 // pred_check
        _
      $region30: #{identity_spoof_forward.1} parent=5 // pred_check_branch
        %161 = sbr.rel (%p158) target = $region32
      $region31: #{identity_spoof_forward.1} parent=5 // pred_region
        %s162 = ssub.s32 %s11, 1
        // Predicated region
        $region33: #{identity_spoof_forward.1} parent=31 // pred_check
          %p163 = pneg %p58
        $region34: #{identity_spoof_forward.1} parent=31 // pred_check_branch
          %165 = sbr.rel (%p163) target = $region36
        $region35: #{identity_spoof_forward.1} parent=31 // pred_region
          %166 = dma.done [#allocation3], 4096
        $region36: #{identity_spoof_forward.1} parent=31 // pred_fallthru
          _
        // Predicated region
        $region37: #{identity_spoof_forward.1} parent=31 // pred_check
          %p167 = pneg %p79
        $region38: #{identity_spoof_forward.1} parent=31 // pred_check_branch
          %169 = sbr.rel (%p167) target = $region40
        $region39: #{identity_spoof_forward.1} parent=31 // pred_region
          %170 = dma.done [#allocation5], 16
        $region40: #{identity_spoof_forward.1} parent=31 // pred_fallthru
          _
        %p171 = scmp.lt.s32.totalorder %s16, 1
        %s172 = scalar_select %p171, %s16, 1
        %s173 = smul.addr %s172, 4
        %s174 = smul.addr %s173, 4
        %s175 = scalar_lea.vmem %s0, %s174
        %p176 = pneg %p37
        %p177 = pneg %p34
        %p178 = pneg %p58
        %p179 = pneg %p55
        %p180 = pneg %p79
        %p181 = pneg %p76
        %p182 = pneg %p105
        %p183 = pneg %p102
        %p184 = scmp.lt.s32.totalorder %s16, 1
        %s185 = scalar_select %p184, %s16, 1
        %s186 = smul.addr %s185, 4
        %s187 = scalar_lea.vmem %s3, %s186
        %p188 = scmp.lt.s32.totalorder %s16, 1
        %s189 = scalar_select %p188, %s16, 1
        %s190 = smul.addr %s189, 4
        %s191 = smul.addr %s190, 4
        %s192 = scalar_lea.vmem %s0, %s191
        %p193 = scmp.lt.s32.totalorder %s16, 1
        %s194 = scalar_select %p193, %s16, 1
        %s195 = smul.addr %s194, 4
        %s196 = scalar_lea.vmem %s3, %s195
        %v198 = vld [vmem:[%s192] sm:$0xff]
        %v199 = vld [vmem:[%s192 + $0x8] sm:$0xff]
        %v200 = vld [vmem:[#allocation2] sm:$0xf]
        %v201 = vld [vmem:[#allocation2 + $0x4] sm:$0xf]
        %v202 = vld [vmem:[#allocation2 + $0x8] sm:$0xf]
        %v203 = vld [vmem:[#allocation2 + $0xc] sm:$0xf]
        %v204 = vld [vmem:[#allocation2 + $0x10] sm:$0xf]
        %v205 = vld [vmem:[#allocation2 + $0x14] sm:$0xf]
        %v206 = vld [vmem:[#allocation2 + $0x18] sm:$0xf]
        %v207 = vld [vmem:[#allocation2 + $0x1c] sm:$0xf]
        %v208 = vld [vmem:[#allocation2 + $0x20] sm:$0xf]
        %v209 = vld [vmem:[#allocation2 + $0x24] sm:$0xf]
        %v210 = vld [vmem:[#allocation2 + $0x28] sm:$0xf]
        %v211 = vld [vmem:[#allocation2 + $0x2c] sm:$0xf]
        %v212 = vld [vmem:[#allocation2 + $0x30] sm:$0xf]
        %v213 = vld [vmem:[#allocation2 + $0x34] sm:$0xf]
        %v214 = vld [vmem:[#allocation2 + $0x38] sm:$0xf]
        %v215 = vld [vmem:[#allocation2 + $0x3c] sm:$0xf]
        %v216 = vld [vmem:[#allocation2 + $0x40] sm:$0xf]
        %v217 = vld [vmem:[#allocation2 + $0x44] sm:$0xf]
        %v218 = vld [vmem:[#allocation2 + $0x48] sm:$0xf]
        %v219 = vld [vmem:[#allocation2 + $0x4c] sm:$0xf]
        %v220 = vld [vmem:[#allocation2 + $0x50] sm:$0xf]
        %v221 = vld [vmem:[#allocation2 + $0x54] sm:$0xf]
        %v222 = vld [vmem:[#allocation2 + $0x58] sm:$0xf]
        %v223 = vld [vmem:[#allocation2 + $0x5c] sm:$0xf]
        %v224 = vld [vmem:[#allocation2 + $0x60] sm:$0xf]
        %v225 = vld [vmem:[#allocation2 + $0x64] sm:$0xf]
        %v226 = vld [vmem:[#allocation2 + $0x68] sm:$0xf]
        %v227 = vld [vmem:[#allocation2 + $0x6c] sm:$0xf]
        %v228 = vld [vmem:[#allocation2 + $0x70] sm:$0xf]
        %v229 = vld [vmem:[#allocation2 + $0x74] sm:$0xf]
        %v230 = vld [vmem:[#allocation2 + $0x78] sm:$0xf]
        %v231 = vld [vmem:[#allocation2 + $0x7c] sm:$0xf]
        %v232 = vld [vmem:[#allocation2 + $0x80] sm:$0xf]
        %v233 = vld [vmem:[#allocation2 + $0x84] sm:$0xf]
        %v234 = vld [vmem:[#allocation2 + $0x88] sm:$0xf]
        %v235 = vld [vmem:[#allocation2 + $0x8c] sm:$0xf]
        %v236 = vld [vmem:[#allocation2 + $0x90] sm:$0xf]
        %v237 = vld [vmem:[#allocation2 + $0x94] sm:$0xf]
        %v238 = vld [vmem:[#allocation2 + $0x98] sm:$0xf]
        %v239 = vld [vmem:[#allocation2 + $0x9c] sm:$0xf]
        %v240 = vld [vmem:[#allocation2 + $0xa0] sm:$0xf]
        %v241 = vld [vmem:[#allocation2 + $0xa4] sm:$0xf]
        %v242 = vld [vmem:[#allocation2 + $0xa8] sm:$0xf]
        %v243 = vld [vmem:[#allocation2 + $0xac] sm:$0xf]
        %v244 = vld [vmem:[#allocation2 + $0xb0] sm:$0xf]
        %v245 = vld [vmem:[#allocation2 + $0xb4] sm:$0xf]
        %v246 = vld [vmem:[#allocation2 + $0xb8] sm:$0xf]
        %v247 = vld [vmem:[#allocation2 + $0xbc] sm:$0xf]
        %v248 = vld [vmem:[#allocation2 + $0xc0] sm:$0xf]
        %v249 = vld [vmem:[#allocation2 + $0xc4] sm:$0xf]
        %v250 = vld [vmem:[#allocation2 + $0xc8] sm:$0xf]
        %v251 = vld [vmem:[#allocation2 + $0xcc] sm:$0xf]
        %v252 = vld [vmem:[#allocation2 + $0xd0] sm:$0xf]
        %v253 = vld [vmem:[#allocation2 + $0xd4] sm:$0xf]
        %v254 = vld [vmem:[#allocation2 + $0xd8] sm:$0xf]
        %v255 = vld [vmem:[#allocation2 + $0xdc] sm:$0xf]
        %v256 = vld [vmem:[#allocation2 + $0xe0] sm:$0xf]
        %v257 = vld [vmem:[#allocation2 + $0xe4] sm:$0xf]
        %v258 = vld [vmem:[#allocation2 + $0xe8] sm:$0xf]
        %v259 = vld [vmem:[#allocation2 + $0xec] sm:$0xf]
        %v260 = vld [vmem:[#allocation2 + $0xf0] sm:$0xf]
        %v261 = vld [vmem:[#allocation2 + $0xf4] sm:$0xf]
        %v262 = vld [vmem:[#allocation2 + $0xf8] sm:$0xf]
        %v263 = vld [vmem:[#allocation2 + $0xfc] sm:$0xf]
        %v264 = vld [vmem:[#allocation4] sm:$0x1]
        %v266 = vlaneseq
        %v267 = vshrl.u32 %v266, 7
        %v268 = vsub.s32 0, %v267
        %v269 = vrot.slane %v264, %v268
        %v273 = vunpack.c.l.b16 %v198
        %v274 = vunpack.c.h.b16 %v198
        %v275 = vunpack.c.l.b16 %v199
        %v276 = vunpack.c.h.b16 %v199
        %v277 = vpack.c.b16 %v273, %v273
        %v278 = vpack.c.b16 %v274, %v274
        %v279 = vpack.c.b16 %v275, %v275
        %v280 = vpack.c.b16 %v276, %v276
        %v349 = vunpack.c.l.b16 %v200
        %v350 = vunpack.c.l.b16 %v201
        %v351 = vunpack.c.l.b16 %v202
        %v352 = vunpack.c.l.b16 %v203
        %v353 = vunpack.c.l.b16 %v204
        %v354 = vunpack.c.l.b16 %v205
        %v355 = vunpack.c.l.b16 %v206
        %v356 = vunpack.c.l.b16 %v207
        %v357 = vunpack.c.l.b16 %v208
        %v358 = vunpack.c.l.b16 %v209
        %v359 = vunpack.c.l.b16 %v210
        %v360 = vunpack.c.l.b16 %v211
        %v361 = vunpack.c.l.b16 %v212
        %v362 = vunpack.c.l.b16 %v213
        %v363 = vunpack.c.l.b16 %v214
        %v364 = vunpack.c.l.b16 %v215
        %v365 = vunpack.c.l.b16 %v216
        %v366 = vunpack.c.l.b16 %v217
        %v367 = vunpack.c.l.b16 %v218
        %v368 = vunpack.c.l.b16 %v219
        %v369 = vunpack.c.l.b16 %v220
        %v370 = vunpack.c.l.b16 %v221
        %v371 = vunpack.c.l.b16 %v222
        %v372 = vunpack.c.l.b16 %v223
        %v373 = vunpack.c.l.b16 %v224
        %v374 = vunpack.c.l.b16 %v225
        %v375 = vunpack.c.l.b16 %v226
        %v376 = vunpack.c.l.b16 %v227
        %v377 = vunpack.c.l.b16 %v228
        %v378 = vunpack.c.l.b16 %v229
        %v379 = vunpack.c.l.b16 %v230
        %v380 = vunpack.c.l.b16 %v231
        %v381 = vunpack.c.l.b16 %v232
        %v382 = vunpack.c.l.b16 %v233
        %v383 = vunpack.c.l.b16 %v234
        %v384 = vunpack.c.l.b16 %v235
        %v385 = vunpack.c.l.b16 %v236
        %v386 = vunpack.c.l.b16 %v237
        %v387 = vunpack.c.l.b16 %v238
        %v388 = vunpack.c.l.b16 %v239
        %v389 = vunpack.c.l.b16 %v240
        %v390 = vunpack.c.l.b16 %v241
        %v391 = vunpack.c.l.b16 %v242
        %v392 = vunpack.c.l.b16 %v243
        %v393 = vunpack.c.l.b16 %v244
        %v394 = vunpack.c.l.b16 %v245
        %v395 = vunpack.c.l.b16 %v246
        %v396 = vunpack.c.l.b16 %v247
        %v397 = vunpack.c.l.b16 %v248
        %v398 = vunpack.c.l.b16 %v249
        %v399 = vunpack.c.l.b16 %v250
        %v400 = vunpack.c.l.b16 %v251
        %v401 = vunpack.c.l.b16 %v252
        %v402 = vunpack.c.l.b16 %v253
        %v403 = vunpack.c.l.b16 %v254
        %v404 = vunpack.c.l.b16 %v255
        %v405 = vunpack.c.l.b16 %v256
        %v406 = vunpack.c.l.b16 %v257
        %v407 = vunpack.c.l.b16 %v258
        %v408 = vunpack.c.l.b16 %v259
        %v409 = vunpack.c.l.b16 %v260
        %v410 = vunpack.c.l.b16 %v261
        %v411 = vunpack.c.l.b16 %v262
        %v412 = vunpack.c.l.b16 %v263
        %v413 = vpack.c.b16 %v350, %v349
        %v414 = vpack.c.b16 %v352, %v351
        %v415 = vpack.c.b16 %v354, %v353
        %v416 = vpack.c.b16 %v356, %v355
        %v417 = vpack.c.b16 %v358, %v357
        %v418 = vpack.c.b16 %v360, %v359
        %v419 = vpack.c.b16 %v362, %v361
        %v420 = vpack.c.b16 %v364, %v363
        %v421 = vpack.c.b16 %v366, %v365
        %v422 = vpack.c.b16 %v368, %v367
        %v423 = vpack.c.b16 %v370, %v369
        %v424 = vpack.c.b16 %v372, %v371
        %v425 = vpack.c.b16 %v374, %v373
        %v426 = vpack.c.b16 %v376, %v375
        %v427 = vpack.c.b16 %v378, %v377
        %v428 = vpack.c.b16 %v380, %v379
        %v429 = vpack.c.b16 %v382, %v381
        %v430 = vpack.c.b16 %v384, %v383
        %v431 = vpack.c.b16 %v386, %v385
        %v432 = vpack.c.b16 %v388, %v387
        %v433 = vpack.c.b16 %v390, %v389
        %v434 = vpack.c.b16 %v392, %v391
        %v435 = vpack.c.b16 %v394, %v393
        %v436 = vpack.c.b16 %v396, %v395
        %v437 = vpack.c.b16 %v398, %v397
        %v438 = vpack.c.b16 %v400, %v399
        %v439 = vpack.c.b16 %v402, %v401
        %v440 = vpack.c.b16 %v404, %v403
        %v441 = vpack.c.b16 %v406, %v405
        %v442 = vpack.c.b16 %v408, %v407
        %v443 = vpack.c.b16 %v410, %v409
        %v444 = vpack.c.b16 %v412, %v411
        %477 = vmatprep.subr.bf16.mxu0 0
        %478 = vmatpush1.bf16.msra.mxu0 %v413
        %479 = vmatprep.subr.bf16.mxu0 0
        %480 = vmatpush1.bf16.msra.mxu0 %v414
        %481 = vmatprep.subr.bf16.mxu0 0
        %482 = vmatpush1.bf16.msra.mxu0 %v415
        %483 = vmatprep.subr.bf16.mxu0 0
        %484 = vmatpush1.bf16.msra.mxu0 %v416
        %485 = vmatprep.subr.bf16.mxu0 0
        %486 = vmatpush1.bf16.msra.mxu0 %v417
        %487 = vmatprep.subr.bf16.mxu0 0
        %488 = vmatpush1.bf16.msra.mxu0 %v418
        %489 = vmatprep.subr.bf16.mxu0 0
        %490 = vmatpush1.bf16.msra.mxu0 %v419
        %491 = vmatprep.subr.bf16.mxu0 0
        %492 = vmatpush1.bf16.msra.mxu0 %v420
        %493 = vmatprep.subr.bf16.mxu0 0
        %494 = vmatpush1.bf16.msra.mxu0 %v421
        %495 = vmatprep.subr.bf16.mxu0 0
        %496 = vmatpush1.bf16.msra.mxu0 %v422
        %497 = vmatprep.subr.bf16.mxu0 0
        %498 = vmatpush1.bf16.msra.mxu0 %v423
        %499 = vmatprep.subr.bf16.mxu0 0
        %500 = vmatpush1.bf16.msra.mxu0 %v424
        %501 = vmatprep.subr.bf16.mxu0 0
        %502 = vmatpush1.bf16.msra.mxu0 %v425
        %503 = vmatprep.subr.bf16.mxu0 0
        %504 = vmatpush1.bf16.msra.mxu0 %v426
        %505 = vmatprep.subr.bf16.mxu0 0
        %506 = vmatpush1.bf16.msra.mxu0 %v427
        %507 = vmatprep.subr.bf16.mxu0 0
        %508 = vmatpush1.bf16.msra.mxu0 %v428
        %509 = vmatprep.mubr.bf16.mxu0 %v278
        %510 = vmatmul.mubr.bf16.gmra.mrb[0].mxu0 %v277
        %v511 = vpop.f32.mrb[0].mxu0
        %v512 = vadd.f32 %v269, %v511
        %v513 = vpop.f32.mrb[0].mxu0
        %v514 = vpop.f32.mrb[0].mxu0
        %v515 = vpop.f32.mrb[0].mxu0
        %516 = vdwg.mxu0
        %517 = vmatprep.subr.bf16.mxu0 0
        %518 = vmatpush1.bf16.msra.mxu0 %v429
        %519 = vmatprep.subr.bf16.mxu0 0
        %520 = vmatpush1.bf16.msra.mxu0 %v430
        %521 = vmatprep.subr.bf16.mxu0 0
        %522 = vmatpush1.bf16.msra.mxu0 %v431
        %523 = vmatprep.subr.bf16.mxu0 0
        %524 = vmatpush1.bf16.msra.mxu0 %v432
        %525 = vmatprep.subr.bf16.mxu0 0
        %526 = vmatpush1.bf16.msra.mxu0 %v433
        %527 = vmatprep.subr.bf16.mxu0 0
        %528 = vmatpush1.bf16.msra.mxu0 %v434
        %529 = vmatprep.subr.bf16.mxu0 0
        %530 = vmatpush1.bf16.msra.mxu0 %v435
        %531 = vmatprep.subr.bf16.mxu0 0
        %532 = vmatpush1.bf16.msra.mxu0 %v436
        %533 = vmatprep.subr.bf16.mxu0 0
        %534 = vmatpush1.bf16.msra.mxu0 %v437
        %535 = vmatprep.subr.bf16.mxu0 0
        %536 = vmatpush1.bf16.msra.mxu0 %v438
        %537 = vmatprep.subr.bf16.mxu0 0
        %538 = vmatpush1.bf16.msra.mxu0 %v439
        %539 = vmatprep.subr.bf16.mxu0 0
        %540 = vmatpush1.bf16.msra.mxu0 %v440
        %541 = vmatprep.subr.bf16.mxu0 0
        %542 = vmatpush1.bf16.msra.mxu0 %v441
        %543 = vmatprep.subr.bf16.mxu0 0
        %544 = vmatpush1.bf16.msra.mxu0 %v442
        %545 = vmatprep.subr.bf16.mxu0 0
        %546 = vmatpush1.bf16.msra.mxu0 %v443
        %547 = vmatprep.subr.bf16.mxu0 0
        %548 = vmatpush1.bf16.msra.mxu0 %v444
        %549 = vmatprep.mubr.bf16.mxu0 %v280
        %550 = vmatmul.mubr.bf16.gmra.mrb[0].mxu0 %v279
        %v551 = vpop.f32.mrb[0].mxu0
        %v552 = vadd.f32 %v512, %v551
        %v553 = vpop.f32.mrb[0].mxu0
        %v554 = vpop.f32.mrb[0].mxu0
        %v555 = vpop.f32.mrb[0].mxu0
        %556 = vdwg.mxu0
        %v557 = vpack.c.bf16 %v552, %v552
        %558 = vst [vmem:[%s196] sm:$0xf] %v557
        %p559 = scmp.lt.s32.totalorder %s16, 1
        %s560 = scalar_select %p559, %s16, 1
        %s561 = smul.addr %s560, 4
        %s562 = scalar_lea.vmem %s3, %s561
        // Predicated region
        $region41: #{identity_spoof_forward.1} parent=31 // pred_check
          %p563 = pneg %p102
        $region42: #{identity_spoof_forward.1} parent=31 // pred_check_branch
          %565 = sbr.rel (%p563) target = $region44
        $region43: #{identity_spoof_forward.1} parent=31 // pred_region
          _
        $region44: #{identity_spoof_forward.1} parent=31 // pred_fallthru
          _
      $region32: #{identity_spoof_forward.1} parent=5 // pred_fallthru
        _
      %p566 = scmp.le.s32.totalorder 2, %s11
      // Predicated region
      $region45: #{identity_spoof_forward.1} parent=5 // pred_check
        %p567 = pneg %p566
      $region46: #{identity_spoof_forward.1} parent=5 // pred_check_branch
        %569 = sbr.rel (%p567) target = $region48
      $region47: #{identity_spoof_forward.1} parent=5 // pred_region
        %s570 = ssub.s32 %s11, 2
        // Predicated region
        $region49: #{identity_spoof_forward.1} parent=47 // pred_check
          %p571 = pneg %p108
        $region50: #{identity_spoof_forward.1} parent=47 // pred_check_branch
          %573 = sbr.rel (%p571) target = $region52
        $region51: #{identity_spoof_forward.1} parent=47 // pred_region
          %p574 = scmp.lt.s32.totalorder %s17, 1
          %s575 = scalar_select %p574, %s17, 1
          %s576 = smul.addr %s575, 4
          %s577 = scalar_lea.vmem %s3, %s576
        $region52: #{identity_spoof_forward.1} parent=47 // pred_fallthru
          _
      $region48: #{identity_spoof_forward.1} parent=5 // pred_fallthru
        _
    $region6: #{identity_spoof_forward.1} parent=1 // loop_footer
      %s15 = sadd.s32 1, %s11
    $region7: #{identity_spoof_forward.1} parent=1 // loop_footer_branch
      %10 = sbr.rel target = $region3
    $region8: #{identity_spoof_forward.1} parent=1 // loop_exit
      _
    %578 = vsyncpa [#allocation3], 1
    %s579 = scalar_lea.sflag [#allocation3], 1
    %580 = vsyncpa %s579, 1
    %581 = vsyncpa [#allocation5], 1

</llo_original>
